<compile_context>
chip_gen: v7x
topology: tpu7x:2x2x1
jax: 0.10.0
libtpu: 0.0.40
codegen_flags: <defaults>
</compile_context>

<pallas_src>
import functools

import jax
import jax.numpy as jnp
from jax.experimental import pallas as pl
from jax.experimental.pallas import tpu as pltpu


def skip_kernel(x1_ref, x2_ref, w1_ref, w2_ref, b_ref, o_ref):
    # x1_ref: (1, C1, TL), x2_ref: (1, C2, TL)
    # w1_ref: (Co, C1),    w2_ref: (Co, C2),   b_ref: (Co, 1)
    # o_ref:  (1, Co, TL)
    acc = jnp.dot(w1_ref[...], x1_ref[0], preferred_element_type=jnp.float32)
    acc = acc + jnp.dot(w2_ref[...], x2_ref[0], preferred_element_type=jnp.float32)
    acc = acc + b_ref[...].astype(jnp.float32)        # (Co, 1) broadcast over TL
    o_ref[0] = jnp.maximum(acc, 0.0).astype(o_ref.dtype)


def _pick_tile_l(L, per_col_bytes, resident_bytes,
                 max_tile_bytes=24 << 20, target=1024):
    """Length tile choice.

    * L <= target: take the whole length (full-dim block, no 128 constraint).
    * else: biggest multiple of 128 <= target that fits the VMEM budget,
      preferring an exact divisor of L, then one whose remainder is still a
      multiple of 128 (lane-dense partial tile).  If L itself isn't a multiple
      of 128 the wrapper pads L, so any multiple-of-128 tile is fine.
    """
    if L <= target:
        return L
    budget = max_tile_bytes - resident_bytes
    max_tl = budget // (2 * per_col_bytes) if budget > 0 else 128
    max_tl = max(128, (max_tl // 128) * 128)
    hi = max(128, min((target // 128) * 128, max_tl))

    best_lane_dense = None
    t = hi
    while t >= 128:
        if L % t == 0:
            return t
        if best_lane_dense is None and (L % t) % 128 == 0:
            best_lane_dense = t
        t -= 128
    if best_lane_dense is not None:
        return best_lane_dense
    return hi  # L not a multiple of 128: wrapper pads L up, so hi is lane-dense.


@functools.partial(jax.jit, static_argnames=("tile_l", "compute_dtype"))
def skip_forward(x1, x2, weight, bias, *, tile_l=None, compute_dtype=None):
    """Pallas implementation of skip.forward(x1, x2).

    x1: (N, C1, L), x2: (N, C2, L)
    weight: (Co, C1 + C2)  -- Conv1d kernel_size=1 weight squeezed on last dim
    bias:   (Co,)
    returns: (N, Co, L), same dtype as x1
    """
    N, C1, L = x1.shape
    _, C2, _ = x2.shape
    Co, Cin = weight.shape
    assert Cin == C1 + C2, "weight in_channels must equal C1 + C2"

    out_dtype = x1.dtype
    if compute_dtype is not None:
        # Optional bf16 MXU path (v6e/v7x); accumulation stays f32 in-kernel.
        x1 = x1.astype(compute_dtype)
        x2 = x2.astype(compute_dtype)
        weight = weight.astype(compute_dtype)
    comp_dtype = x1.dtype
    in_itemsize = jnp.dtype(comp_dtype).itemsize
    out_itemsize = jnp.dtype(out_dtype).itemsize

    # Split W at trace time -> no concat anywhere (HBM or VMEM).
    w1 = weight[:, :C1]
    w2 = weight[:, C1:]
    b2d = bias.reshape(Co, 1).astype(jnp.float32)

    # VMEM sizing (per grid step): double-buffered x1/x2/out tiles + resident W/b.
    resident_bytes = Co * Cin * in_itemsize + Co * 4
    per_col_bytes = (C1 + C2) * in_itemsize + Co * out_itemsize
    # TODO(synk): for very large Cin/Co (resident weights alone near the v7x
    # 64 MiB budget) the Co axis should also be tiled instead of kept resident.

    if tile_l is not None:
        assert tile_l == L or tile_l % 128 == 0, (
            "tile_l must equal L or be a multiple of 128 (BlockSpec (8,128) rule)")
        TL = tile_l
    else:
        TL = _pick_tile_l(L, per_col_bytes, resident_bytes)

    # Keep every tile lane-dense: pad L when tiling a non-128-multiple length.
    L_pad = L
    if TL < L and L % 128 != 0:
        L_pad = ((L + 127) // 128) * 128
        pad = L_pad - L
        x1 = jnp.pad(x1, ((0, 0), (0, 0), (0, pad)))
        x2 = jnp.pad(x2, ((0, 0), (0, 0), (0, pad)))

    num_l = pl.cdiv(L_pad, TL)

    # Advise XLA scheduler; also set a matching VMEM limit (safe on v7x 64 MiB).
    cost = pl.CostEstimate(
        flops=2 * N * Co * Cin * L,
        transcendentals=0,
        bytes_accessed=(in_itemsize * (N * L * Cin + Co * Cin)
                        + out_itemsize * N * L * Co + 4 * Co),
    )
    vmem_est = 2 * per_col_bytes * TL + resident_bytes
    vmem_limit = int(min(48 << 20, max(32 << 20, vmem_est + (4 << 20))))

    out_padded = pl.pallas_call(
        skip_kernel,
        out_shape=jax.ShapeDtypeStruct((N, Co, L_pad), out_dtype),
        grid_spec=pltpu.PrefetchScalarGridSpec(
            num_scalar_prefetch=0,
            grid=(N, num_l),
            in_specs=[
                pl.BlockSpec((1, C1, TL), lambda n, l: (n, 0, l)),
                pl.BlockSpec((1, C2, TL), lambda n, l: (n, 0, l)),
                pl.BlockSpec((Co, C1), lambda n, l: (0, 0)),   # resident W half 1
                pl.BlockSpec((Co, C2), lambda n, l: (0, 0)),   # resident W half 2
                pl.BlockSpec((Co, 1), lambda n, l: (0, 0)),    # resident bias
            ],
            out_specs=pl.BlockSpec((1, Co, TL), lambda n, l: (n, 0, l)),
        ),
        compiler_params=pltpu.CompilerParams(
            dimension_semantics=("parallel", "parallel"),
            vmem_limit_bytes=vmem_limit),
        cost_estimate=cost,
    )(x1, x2, w1, w2, b2d)

    if L_pad != L:
        out_padded = out_padded[:, :, :L]
    return out_padded


if __name__ == "__main__":
    # Small shapes: batch=2, x1/x2 channels = 4 each -> in_channel=8, out_channel=8, length=16
    N, C1, C2, Co, L = 2, 4, 4, 8, 16
    in_channel = C1 + C2

    key = jax.random.PRNGKey(0)
    k1, k2, kw, kb = jax.random.split(key, 4)

    x1 = jax.random.normal(k1, (N, C1, L), dtype=jnp.float32)
    x2 = jax.random.normal(k2, (N, C2, L), dtype=jnp.float32)

    # Deterministic parameter init mimicking PyTorch Conv1d default (uniform +/- 1/sqrt(fan_in))
    bound = 1.0 / jnp.sqrt(jnp.float32(in_channel * 1))
    weight = jax.random.uniform(kw, (Co, in_channel), dtype=jnp.float32,
                                minval=-bound, maxval=bound)
    bias = jax.random.uniform(kb, (Co,), dtype=jnp.float32,
                              minval=-bound, maxval=bound)

    out = skip_forward(x1, x2, weight, bias)
    out = jax.block_until_ready(out)

    # Pure-JAX reference (cat -> 1x1 conv -> relu)
    x_cat = jnp.concatenate([x1, x2], axis=1)             # (N, Cin, L)
    ref = jnp.einsum("oc,ncl->nol", weight, x_cat) + bias[None, :, None]
    ref = jnp.maximum(ref, 0.0)

    assert out.shape == (N, Co, L)
    assert jnp.allclose(out, ref, atol=1e-5, rtol=1e-5)
    print("KERNEL_OK")
</pallas_src>

<mosaic_0001>
module attributes {stable_mosaic.version = 11 : i64} {
  func.func @skip_kernel(%arg0: i32, %arg1: i32, %arg2: memref<1x4x16xf32, #tpu.memory_space<vmem>>, %arg3: memref<1x4x16xf32, #tpu.memory_space<vmem>>, %arg4: memref<8x4xf32, #tpu.memory_space<vmem>>, %arg5: memref<8x4xf32, #tpu.memory_space<vmem>>, %arg6: memref<8x1xf32, #tpu.memory_space<vmem>>, %arg7: memref<1x8x16xf32, #tpu.memory_space<vmem>>) attributes {dimension_semantics = [#tpu.dimension_semantics<parallel>, #tpu.dimension_semantics<parallel>], iteration_bounds = array<i64: 2, 1>, scalar_prefetch = 0 : i64, scratch_operands = 0 : i64, tpu.core_type = #tpu.core_type<tc>, window_params = [{transform_indices = @transform_0, window_bounds = array<i64: 1, 4, 16>}, {transform_indices = @transform_1, window_bounds = array<i64: 1, 4, 16>}, {pipeline_mode = #tpu.pipeline_mode<synchronous>, transform_indices = @transform_2, window_bounds = array<i64: 8, 4>}, {pipeline_mode = #tpu.pipeline_mode<synchronous>, transform_indices = @transform_3, window_bounds = array<i64: 8, 4>}, {pipeline_mode = #tpu.pipeline_mode<synchronous>, transform_indices = @transform_4, window_bounds = array<i64: 8, 1>}, {transform_indices = @transform_5, window_bounds = array<i64: 1, 8, 16>}]} {
    %c0 = arith.constant 0 : index
    %c0_0 = arith.constant 0 : index
    %0 = vector.load %arg4[%c0, %c0_0] : memref<8x4xf32, #tpu.memory_space<vmem>>, vector<8x4xf32>
    %c0_1 = arith.constant 0 : index
    %c0_2 = arith.constant 0 : index
    %c0_3 = arith.constant 0 : index
    %1 = vector.load %arg2[%c0_1, %c0_2, %c0_3] : memref<1x4x16xf32, #tpu.memory_space<vmem>>, vector<1x4x16xf32>
    %2 = vector.shape_cast %1 : vector<1x4x16xf32> to vector<4x16xf32>
    %cst = arith.constant dense<0.000000e+00> : vector<8x16xf32>
    %3 = tpu.matmul %0, %2, %cst {dimension_numbers = #tpu.dot_dimension_numbers<[1], [0], [0], [1], [0, 0, 1, 1], [], []>} : vector<8x4xf32>, vector<4x16xf32>, vector<8x16xf32> -> vector<8x16xf32>
    %c0_4 = arith.constant 0 : index
    %c0_5 = arith.constant 0 : index
    %4 = vector.load %arg5[%c0_4, %c0_5] : memref<8x4xf32, #tpu.memory_space<vmem>>, vector<8x4xf32>
    %c0_6 = arith.constant 0 : index
    %c0_7 = arith.constant 0 : index
    %c0_8 = arith.constant 0 : index
    %5 = vector.load %arg3[%c0_6, %c0_7, %c0_8] : memref<1x4x16xf32, #tpu.memory_space<vmem>>, vector<1x4x16xf32>
    %6 = vector.shape_cast %5 : vector<1x4x16xf32> to vector<4x16xf32>
    %cst_9 = arith.constant dense<0.000000e+00> : vector<8x16xf32>
    %7 = tpu.matmul %4, %6, %cst_9 {dimension_numbers = #tpu.dot_dimension_numbers<[1], [0], [0], [1], [0, 0, 1, 1], [], []>} : vector<8x4xf32>, vector<4x16xf32>, vector<8x16xf32> -> vector<8x16xf32>
    %8 = arith.addf %3, %7 : vector<8x16xf32>
    %c0_10 = arith.constant 0 : index
    %c0_11 = arith.constant 0 : index
    %9 = vector.load %arg6[%c0_10, %c0_11] : memref<8x1xf32, #tpu.memory_space<vmem>>, vector<8x1xf32>
    %10 = vector.broadcast %9 : vector<8x1xf32> to vector<8x16xf32>
    %11 = arith.addf %8, %10 : vector<8x16xf32>
    %cst_12 = arith.constant 0.000000e+00 : f32
    %12 = vector.broadcast %cst_12 : f32 to vector<8x16xf32>
    %13 = arith.maximumf %11, %12 : vector<8x16xf32>
    %c0_13 = arith.constant 0 : index
    %c0_14 = arith.constant 0 : index
    %c0_15 = arith.constant 0 : index
    %14 = vector.load %arg7[%c0_13, %c0_14, %c0_15] : memref<1x8x16xf32, #tpu.memory_space<vmem>>, vector<1x8x16xf32>
    %15 = vector.shape_cast %14 : vector<1x8x16xf32> to vector<8x16xf32>
    %16 = vector.shape_cast %13 : vector<8x16xf32> to vector<1x8x16xf32>
    tpu.vector_store %arg7[%c0_13, %c0_14, %c0_15], %16 {strides = array<i32>} : memref<1x8x16xf32, #tpu.memory_space<vmem>>, vector<1x8x16xf32>,
    return
  }
  func.func @transform_0(%arg0: i32, %arg1: i32) -> (i32, i32, i32) {
    %c0_i32 = arith.constant 0 : i32
    %c0_i32_0 = arith.constant 0 : i32
    return %arg0, %c0_i32, %arg1 : i32, i32, i32
  }
  func.func @transform_1(%arg0: i32, %arg1: i32) -> (i32, i32, i32) {
    %c0_i32 = arith.constant 0 : i32
    %c0_i32_0 = arith.constant 0 : i32
    return %arg0, %c0_i32, %arg1 : i32, i32, i32
  }
  func.func @transform_2(%arg0: i32, %arg1: i32) -> (i32, i32) {
    %c0_i32 = arith.constant 0 : i32
    %c0_i32_0 = arith.constant 0 : i32
    %c0_i32_1 = arith.constant 0 : i32
    return %c0_i32, %c0_i32_0 : i32, i32
  }
  func.func @transform_3(%arg0: i32, %arg1: i32) -> (i32, i32) {
    %c0_i32 = arith.constant 0 : i32
    %c0_i32_0 = arith.constant 0 : i32
    %c0_i32_1 = arith.constant 0 : i32
    return %c0_i32, %c0_i32_0 : i32, i32
  }
  func.func @transform_4(%arg0: i32, %arg1: i32) -> (i32, i32) {
    %c0_i32 = arith.constant 0 : i32
    %c0_i32_0 = arith.constant 0 : i32
    %c0_i32_1 = arith.constant 0 : i32
    return %c0_i32, %c0_i32_0 : i32, i32
  }
  func.func @transform_5(%arg0: i32, %arg1: i32) -> (i32, i32, i32) {
    %c0_i32 = arith.constant 0 : i32
    %c0_i32_0 = arith.constant 0 : i32
    return %arg0, %c0_i32, %arg1 : i32, i32, i32
  }
}

</mosaic_0001>

<llo_original>
// kernel: skip_forward.1
$region0: #{skip_forward.1}
  #allocation0 [shape = 'u32[]', space=smem, size = 0x4, offset = 0x4, fixed_abs, tag = 'smem constant byte address 0x4 - core index']
  #allocation1 [shape = 'u32[144,128]{1,0:T(1,128)}', space=vmem, size = 0x12000, scoped, tag = 'internal scratch']
  %s0 = inlined_call_operand.vmem [shape: f32[2,4,16], index: 0, kind: input, shape index: {}]
  %s1 = inlined_call_operand.vmem [shape: f32[2,4,16], index: 1, kind: input, shape index: {}]
  %s2 = inlined_call_operand.vmem [shape: f32[8,4], index: 2, kind: input, shape index: {}]
  %s3 = inlined_call_operand.vmem [shape: f32[8,4], index: 3, kind: input, shape index: {}]
  %s4 = inlined_call_operand.vmem [shape: f32[8,1], index: 4, kind: input, shape index: {}]
  %s5 = inlined_call_operand.hbm [shape: f32[2,8,16], index: 5, kind: output, shape index: {}]
  %s6 = sld [smem:[#allocation0]]
  $region53: #{skip_forward.1} parent=0
    _
  %s8 = ssub.s32 1, %s6
  %s9 = scalar_select 0, %s8, %s6
  $region1: #{skip_forward.1} parent=0
    #allocation2 [shape = 'u8[8192]{0}', space=vmem, size = 0x2000, scoped, tag = 'output window, operand 0']
    #allocation3 [shape = 's32[2]{0}', space=sflag, size = 0x8, scoped, tag = 'scoped memory for skip_forward.1']
    %10 = vsyncpa [#allocation3], 0
    %s11 = scalar_lea.sflag [#allocation3], 1
    %12 = vsyncpa %s11, 0
    loop: start=0, step=1, limit=4
    $region2: #{skip_forward.1} parent=1 // loop_pre_header
      _
    $region3: #{skip_forward.1} parent=1 // loop_header
      %s14 = sphi 0, %s18
      %p15 = scmp.ge.s32.totalorder %s14, 4
      %s21 = sphi 0, %s33
      %s22 = sphi 0, %s29
      %s23 = sphi 0, %s21
      %s24 = sphi 0, %s22
      %s25 = sphi 0, %s23
      %s26 = sphi 0, %s24
      %s38 = sphi 0, %s40
      %s41 = sphi 0, %s38
      %s42 = sphi 0, %s41
      %s58 = sphi 0, %s42
      %s66 = sphi 0, %s68
      %s69 = sphi 0, %s66
      %s70 = sphi 0, %s69
      %s86 = sphi 0, %s70
      %s90 = sphi 0, %s90
      %s92 = sphi 0, %s90
      %s93 = sphi 0, %s92
      %s107 = sphi 0, %s93
      %s111 = sphi 0, %s111
      %s113 = sphi 0, %s111
      %s114 = sphi 0, %s113
      %s128 = sphi 0, %s114
      %s132 = sphi 0, %s132
      %s134 = sphi 0, %s132
      %s135 = sphi 0, %s134
      %s149 = sphi 0, %s135
      %s157 = sphi 0, %s159
      %s160 = sphi 0, %s157
      %s161 = sphi 0, %s160
      %s177 = sphi 0, %s161
    $region4: #{skip_forward.1} parent=1 // loop_header_branch
      %17 = sbr.rel (%p15) target = $region8
    $region5: #{skip_forward.1} parent=1 // loop_body
      %s19 = ssub.s32 %s14, 1
      %s20 = ssub.s32 %s14, 2
      %s27 = sadd.s32 1, %s22
      %p28 = scmp.ge.s32.totalorder %s27, 1
      %s29 = scalar_select %p28, 0, %s27
      %s30 = sadd.s32 1, %s21
      %s31 = scalar_select %p28, %s30, %s21
      %p32 = scmp.ge.s32.totalorder %s31, 2
      %s33 = scalar_select %p32, 0, %s31
      %s34 = ssub.s32 %s21, %s33
      %s35 = ssub.s32 %s22, %s29
      %s36 = sor.u32 %s34, %s35
      %p37 = scmp.eq.s32.totalorder %s36, 0
      %s39 = sadd.s32 %s38, 1
      %s40 = scalar_select %p37, %s38, %s39
      %p43 = pneg %p37
      %p44 = scmp.eq.s32.totalorder %s14, 1
      %p45 = por %p43, %p44
      %p46 = scmp.ne.s32.totalorder %s38, %s41
      %p47 = scmp.eq.s32.totalorder %s14, 0
      %p48 = por %p46, %p47
      %p49 = scmp.ne.s32.totalorder %s38, %s41
      %p50 = scmp.eq.s32.totalorder %s19, 1
      %p51 = por %p49, %p50
      %p52 = scmp.ne.s32.totalorder %s41, %s42
      %p53 = scmp.eq.s32.totalorder %s19, 0
      %p54 = por %p52, %p53
      %p55 = scmp.ne.s32.totalorder %s41, %s42
      %p56 = scmp.eq.s32.totalorder %s20, 1
      %p57 = por %p55, %p56
      %p59 = scmp.ne.s32.totalorder %s42, %s58
      %p60 = scmp.eq.s32.totalorder %s20, 0
      %p61 = por %p59, %p60
      %s62 = ssub.s32 %s21, %s33
      %s63 = ssub.s32 %s22, %s29
      %s64 = sor.u32 %s62, %s63
      %p65 = scmp.eq.s32.totalorder %s64, 0
      %s67 = sadd.s32 %s66, 1
      %s68 = scalar_select %p65, %s66, %s67
      %p71 = pneg %p65
      %p72 = scmp.eq.s32.totalorder %s14, 1
      %p73 = por %p71, %p72
      %p74 = scmp.ne.s32.totalorder %s66, %s69
      %p75 = scmp.eq.s32.totalorder %s14, 0
      %p76 = por %p74, %p75
      %p77 = scmp.ne.s32.totalorder %s66, %s69
      %p78 = scmp.eq.s32.totalorder %s19, 1
      %p79 = por %p77, %p78
      %p80 = scmp.ne.s32.totalorder %s69, %s70
      %p81 = scmp.eq.s32.totalorder %s19, 0
      %p82 = por %p80, %p81
      %p83 = scmp.ne.s32.totalorder %s69, %s70
      %p84 = scmp.eq.s32.totalorder %s20, 1
      %p85 = por %p83, %p84
      %p87 = scmp.ne.s32.totalorder %s70, %s86
      %p88 = scmp.eq.s32.totalorder %s20, 0
      %p89 = por %p87, %p88
      %s91 = sadd.s32 %s90, 1
      %p94 = scmp.eq.s32.totalorder %s14, 1
      %p95 = scmp.ne.s32.totalorder %s90, %s92
      %p96 = scmp.eq.s32.totalorder %s14, 0
      %p97 = por %p95, %p96
      %p98 = scmp.ne.s32.totalorder %s90, %s92
      %p99 = scmp.eq.s32.totalorder %s19, 1
      %p100 = por %p98, %p99
      %p101 = scmp.ne.s32.totalorder %s92, %s93
      %p102 = scmp.eq.s32.totalorder %s19, 0
      %p103 = por %p101, %p102
      %p104 = scmp.ne.s32.totalorder %s92, %s93
      %p105 = scmp.eq.s32.totalorder %s20, 1
      %p106 = por %p104, %p105
      %p108 = scmp.ne.s32.totalorder %s93, %s107
      %p109 = scmp.eq.s32.totalorder %s20, 0
      %p110 = por %p108, %p109
      %s112 = sadd.s32 %s111, 1
      %p115 = scmp.eq.s32.totalorder %s14, 1
      %p116 = scmp.ne.s32.totalorder %s111, %s113
      %p117 = scmp.eq.s32.totalorder %s14, 0
      %p118 = por %p116, %p117
      %p119 = scmp.ne.s32.totalorder %s111, %s113
      %p120 = scmp.eq.s32.totalorder %s19, 1
      %p121 = por %p119, %p120
      %p122 = scmp.ne.s32.totalorder %s113, %s114
      %p123 = scmp.eq.s32.totalorder %s19, 0
      %p124 = por %p122, %p123
      %p125 = scmp.ne.s32.totalorder %s113, %s114
      %p126 = scmp.eq.s32.totalorder %s20, 1
      %p127 = por %p125, %p126
      %p129 = scmp.ne.s32.totalorder %s114, %s128
      %p130 = scmp.eq.s32.totalorder %s20, 0
      %p131 = por %p129, %p130
      %s133 = sadd.s32 %s132, 1
      %p136 = scmp.eq.s32.totalorder %s14, 1
      %p137 = scmp.ne.s32.totalorder %s132, %s134
      %p138 = scmp.eq.s32.totalorder %s14, 0
      %p139 = por %p137, %p138
      %p140 = scmp.ne.s32.totalorder %s132, %s134
      %p141 = scmp.eq.s32.totalorder %s19, 1
      %p142 = por %p140, %p141
      %p143 = scmp.ne.s32.totalorder %s134, %s135
      %p144 = scmp.eq.s32.totalorder %s19, 0
      %p145 = por %p143, %p144
      %p146 = scmp.ne.s32.totalorder %s134, %s135
      %p147 = scmp.eq.s32.totalorder %s20, 1
      %p148 = por %p146, %p147
      %p150 = scmp.ne.s32.totalorder %s135, %s149
      %p151 = scmp.eq.s32.totalorder %s20, 0
      %p152 = por %p150, %p151
      %s153 = ssub.s32 %s21, %s33
      %s154 = ssub.s32 %s22, %s29
      %s155 = sor.u32 %s153, %s154
      %p156 = scmp.eq.s32.totalorder %s155, 0
      %s158 = sadd.s32 %s157, 1
      %s159 = scalar_select %p156, %s157, %s158
      %p162 = pneg %p156
      %p163 = scmp.eq.s32.totalorder %s14, 1
      %p164 = por %p162, %p163
      %p165 = scmp.ne.s32.totalorder %s157, %s160
      %p166 = scmp.eq.s32.totalorder %s14, 0
      %p167 = por %p165, %p166
      %p168 = scmp.ne.s32.totalorder %s157, %s160
      %p169 = scmp.eq.s32.totalorder %s19, 1
      %p170 = por %p168, %p169
      %p171 = scmp.ne.s32.totalorder %s160, %s161
      %p172 = scmp.eq.s32.totalorder %s19, 0
      %p173 = por %p171, %p172
      %p174 = scmp.ne.s32.totalorder %s160, %s161
      %p175 = scmp.eq.s32.totalorder %s20, 1
      %p176 = por %p174, %p175
      %p178 = scmp.ne.s32.totalorder %s161, %s177
      %p179 = scmp.eq.s32.totalorder %s20, 0
      %p180 = por %p178, %p179
      %p181 = scmp.le.s32.totalorder 1, %s14
      %p182 = scmp.lt.s32.totalorder %s14, 3
      %p183 = pnand %p181, %p182
      %p184 = pneg %p183
      // Predicated region
      $region9: #{skip_forward.1} parent=5 // pred_check
        _
      $region10: #{skip_forward.1} parent=5 // pred_check_branch
        %186 = sbr.rel (%p183) target = $region12
      $region11: #{skip_forward.1} parent=5 // pred_region
        %s187 = ssub.s32 %s14, 1
        // Predicated region
        $region13: #{skip_forward.1} parent=11 // pred_check
          %p188 = pneg %p103
        $region14: #{skip_forward.1} parent=11 // pred_check_branch
          %190 = sbr.rel (%p188) target = $region16
        $region15: #{skip_forward.1} parent=11 // pred_region
          _
        $region16: #{skip_forward.1} parent=11 // pred_fallthru
          _
        // Predicated region
        $region17: #{skip_forward.1} parent=11 // pred_check
          %p191 = pneg %p124
        $region18: #{skip_forward.1} parent=11 // pred_check_branch
          %193 = sbr.rel (%p191) target = $region20
        $region19: #{skip_forward.1} parent=11 // pred_region
          _
        $region20: #{skip_forward.1} parent=11 // pred_fallthru
          _
        // Predicated region
        $region21: #{skip_forward.1} parent=11 // pred_check
          %p194 = pneg %p145
        $region22: #{skip_forward.1} parent=11 // pred_check_branch
          %196 = sbr.rel (%p194) target = $region24
        $region23: #{skip_forward.1} parent=11 // pred_region
          _
        $region24: #{skip_forward.1} parent=11 // pred_fallthru
          _
      $region12: #{skip_forward.1} parent=5 // pred_fallthru
        _
      %p197 = scmp.lt.s32.totalorder %s14, 2
      // Predicated region
      $region25: #{skip_forward.1} parent=5 // pred_check
        %p198 = pneg %p197
      $region26: #{skip_forward.1} parent=5 // pred_check_branch
        %200 = sbr.rel (%p198) target = $region28
      $region27: #{skip_forward.1} parent=5 // pred_region
        // Predicated region
        $region29: #{skip_forward.1} parent=27 // pred_check
          %p201 = pneg %p48
        $region30: #{skip_forward.1} parent=27 // pred_check_branch
          %203 = sbr.rel (%p201) target = $region32
        $region31: #{skip_forward.1} parent=27 // pred_region
          %p204 = scmp.lt.s32.totalorder %s21, 1
          %s205 = scalar_select %p204, %s21, 1
          %p206 = scmp.lt.s32.totalorder %s22, 0
          %s207 = scalar_select %p206, %s22, 0
          %s208 = sadd.s32 %s207, %s205
          %s209 = smul.addr %s208, 4
          %s210 = scalar_lea.vmem %s0, %s209
        $region32: #{skip_forward.1} parent=27 // pred_fallthru
          _
        // Predicated region
        $region33: #{skip_forward.1} parent=27 // pred_check
          %p211 = pneg %p76
        $region34: #{skip_forward.1} parent=27 // pred_check_branch
          %213 = sbr.rel (%p211) target = $region36
        $region35: #{skip_forward.1} parent=27 // pred_region
          %p214 = scmp.lt.s32.totalorder %s21, 1
          %s215 = scalar_select %p214, %s21, 1
          %p216 = scmp.lt.s32.totalorder %s22, 0
          %s217 = scalar_select %p216, %s22, 0
          %s218 = sadd.s32 %s217, %s215
          %s219 = smul.addr %s218, 4
          %s220 = scalar_lea.vmem %s1, %s219
        $region36: #{skip_forward.1} parent=27 // pred_fallthru
          _
      $region28: #{skip_forward.1} parent=5 // pred_fallthru
        _
      %p221 = scmp.le.s32.totalorder 1, %s14
      %p222 = scmp.lt.s32.totalorder %s14, 3
      %p223 = pnand %p221, %p222
      %p224 = pneg %p223
      // Predicated region
      $region37: #{skip_forward.1} parent=5 // pred_check
        _
      $region38: #{skip_forward.1} parent=5 // pred_check_branch
        %226 = sbr.rel (%p223) target = $region40
      $region39: #{skip_forward.1} parent=5 // pred_region
        %s227 = ssub.s32 %s14, 1
        %p228 = scmp.lt.s32.totalorder %s23, 1
        %s229 = scalar_select %p228, %s23, 1
        %p230 = scmp.lt.s32.totalorder %s24, 0
        %s231 = scalar_select %p230, %s24, 0
        %s232 = sadd.s32 %s231, %s229
        %s233 = smul.addr %s232, 4
        %s234 = scalar_lea.vmem %s0, %s233
        %p235 = pneg %p54
        %p236 = pneg %p51
        %p237 = scmp.lt.s32.totalorder %s23, 1
        %s238 = scalar_select %p237, %s23, 1
        %p239 = scmp.lt.s32.totalorder %s24, 0
        %s240 = scalar_select %p239, %s24, 0
        %s241 = sadd.s32 %s240, %s238
        %s242 = smul.addr %s241, 4
        %s243 = scalar_lea.vmem %s1, %s242
        %p244 = pneg %p82
        %p245 = pneg %p79
        %p246 = pneg %p103
        %p247 = pneg %p100
        %p248 = pneg %p124
        %p249 = pneg %p121
        %p250 = pneg %p145
        %p251 = pneg %p142
        %p252 = pneg %p173
        %p253 = pneg %p170
        %s254 = sand.u32 %s160, 1
        %s255 = scalar_lea.sflag [#allocation3], %s254
        %s256 = sand.u32 %s160, 1
        %s257 = smul.addr %s256, 8
        %s258 = scalar_lea.vmem [#allocation2], %s257
        %p259 = scmp.lt.s32.totalorder %s23, 1
        %s260 = scalar_select %p259, %s23, 1
        %p261 = scmp.lt.s32.totalorder %s24, 0
        %s262 = scalar_select %p261, %s24, 0
        %s263 = sadd.s32 %s262, %s260
        %s264 = smul.addr %s263, 4
        %s265 = scalar_lea.vmem %s0, %s264
        %p266 = scmp.lt.s32.totalorder %s23, 1
        %s267 = scalar_select %p266, %s23, 1
        %p268 = scmp.lt.s32.totalorder %s24, 0
        %s269 = scalar_select %p268, %s24, 0
        %s270 = sadd.s32 %s269, %s267
        %s271 = smul.addr %s270, 4
        %s272 = scalar_lea.vmem %s1, %s271
        %v273 = vld [vmem:[%s2] sm:$0xff]
        %v274 = vld [vmem:[%s265] sm:$0xf]
        %v275 = vld [vmem:[%s3] sm:$0xff]
        %v276 = vld [vmem:[%s272] sm:$0xf]
        %vm277 = vcmask 31744
        %v279 = vsel %vm277, %v275, 0
        %vm281 = vcmask 1043456
        %v283 = vsel %vm281, %v276, 0
        %285 = vmatprep.subr.mxu0 0.0
        %286 = vmatpush1.msra.mxu0 %v283
        %287 = vmatprep.subr.mxu0 0.0
        %288 = vmatpush1.msra.mxu0 0.0
        %289 = vmatprep.subr.mxu0 0.0
        %290 = vmatpush1.msra.mxu0 0.0
        %291 = vmatprep.subr.mxu0 0.0
        %292 = vmatpush1.msra.mxu0 0.0
        %293 = vmatprep.subr.mxu0 0.0
        %294 = vmatpush1.msra.mxu0 0.0
        %295 = vmatprep.subr.mxu0 0.0
        %296 = vmatpush1.msra.mxu0 0.0
        %297 = vmatprep.subr.mxu0 0.0
        %298 = vmatpush1.msra.mxu0 0.0
        %299 = vmatprep.subr.mxu0 0.0
        %300 = vmatpush1.msra.mxu0 0.0
        %301 = vmatprep.subr.mxu0 0.0
        %302 = vmatpush1.msra.mxu0 0.0
        %303 = vmatprep.subr.mxu0 0.0
        %304 = vmatpush1.msra.mxu0 0.0
        %305 = vmatprep.subr.mxu0 0.0
        %306 = vmatpush1.msra.mxu0 0.0
        %307 = vmatprep.subr.mxu0 0.0
        %308 = vmatpush1.msra.mxu0 0.0
        %309 = vmatprep.subr.mxu0 0.0
        %310 = vmatpush1.msra.mxu0 0.0
        %311 = vmatprep.subr.mxu0 0.0
        %312 = vmatpush1.msra.mxu0 0.0
        %313 = vmatprep.subr.mxu0 0.0
        %314 = vmatpush1.msra.mxu0 0.0
        %315 = vmatprep.subr.mxu0 0.0
        %316 = vmatpush1.msra.mxu0 0.0
        %317 = vmatprep.subr.mxu0 0.0
        %318 = vmatpush1.msra.mxu0 0.0
        %319 = vmatprep.subr.mxu0 0.0
        %320 = vmatpush1.msra.mxu0 0.0
        %321 = vmatprep.subr.mxu0 0.0
        %322 = vmatpush1.msra.mxu0 0.0
        %323 = vmatprep.subr.mxu0 0.0
        %324 = vmatpush1.msra.mxu0 0.0
        %325 = vmatprep.subr.mxu0 0.0
        %326 = vmatpush1.msra.mxu0 0.0
        %327 = vmatprep.subr.mxu0 0.0
        %328 = vmatpush1.msra.mxu0 0.0
        %329 = vmatprep.subr.mxu0 0.0
        %330 = vmatpush1.msra.mxu0 0.0
        %331 = vmatprep.subr.mxu0 0.0
        %332 = vmatpush1.msra.mxu0 0.0
        %333 = vmatprep.subr.mxu0 0.0
        %334 = vmatpush1.msra.mxu0 0.0
        %335 = vmatprep.subr.mxu0 0.0
        %336 = vmatpush1.msra.mxu0 0.0
        %337 = vmatprep.subr.mxu0 0.0
        %338 = vmatpush1.msra.mxu0 0.0
        %339 = vmatprep.subr.mxu0 0.0
        %340 = vmatpush1.msra.mxu0 0.0
        %341 = vmatprep.subr.mxu0 0.0
        %342 = vmatpush1.msra.mxu0 0.0
        %343 = vmatprep.subr.mxu0 0.0
        %344 = vmatpush1.msra.mxu0 0.0
        %345 = vmatprep.subr.mxu0 0.0
        %346 = vmatpush1.msra.mxu0 0.0
        %347 = vmatprep.subr.mxu0 0.0
        %348 = vmatpush1.msra.mxu0 0.0
        %349 = vmatprep.mubr.f32.mxu0 0.0
        %350 = vmatmul.mubr.f32.gmra.mrb[0].mxu0 %v279
        %v351 = vpop.f32.mrb[0].mxu0
        %v352 = vadd.f32 0.0, %v351
        %v353 = vpop.f32.mrb[0].mxu0
        %354 = vdwg.mxu0
        %v356 = vsel %vm277, %v273, 0
        %v359 = vsel %vm281, %v274, 0
        %361 = vmatprep.subr.mxu0 0.0
        %362 = vmatpush1.msra.mxu0 %v359
        %363 = vmatprep.subr.mxu0 0.0
        %364 = vmatpush1.msra.mxu0 0.0
        %365 = vmatprep.subr.mxu0 0.0
        %366 = vmatpush1.msra.mxu0 0.0
        %367 = vmatprep.subr.mxu0 0.0
        %368 = vmatpush1.msra.mxu0 0.0
        %369 = vmatprep.subr.mxu0 0.0
        %370 = vmatpush1.msra.mxu0 0.0
        %371 = vmatprep.subr.mxu0 0.0
        %372 = vmatpush1.msra.mxu0 0.0
        %373 = vmatprep.subr.mxu0 0.0
        %374 = vmatpush1.msra.mxu0 0.0
        %375 = vmatprep.subr.mxu0 0.0
        %376 = vmatpush1.msra.mxu0 0.0
        %377 = vmatprep.subr.mxu0 0.0
        %378 = vmatpush1.msra.mxu0 0.0
        %379 = vmatprep.subr.mxu0 0.0
        %380 = vmatpush1.msra.mxu0 0.0
        %381 = vmatprep.subr.mxu0 0.0
        %382 = vmatpush1.msra.mxu0 0.0
        %383 = vmatprep.subr.mxu0 0.0
        %384 = vmatpush1.msra.mxu0 0.0
        %385 = vmatprep.subr.mxu0 0.0
        %386 = vmatpush1.msra.mxu0 0.0
        %387 = vmatprep.subr.mxu0 0.0
        %388 = vmatpush1.msra.mxu0 0.0
        %389 = vmatprep.subr.mxu0 0.0
        %390 = vmatpush1.msra.mxu0 0.0
        %391 = vmatprep.subr.mxu0 0.0
        %392 = vmatpush1.msra.mxu0 0.0
        %393 = vmatprep.subr.mxu0 0.0
        %394 = vmatpush1.msra.mxu0 0.0
        %395 = vmatprep.subr.mxu0 0.0
        %396 = vmatpush1.msra.mxu0 0.0
        %397 = vmatprep.subr.mxu0 0.0
        %398 = vmatpush1.msra.mxu0 0.0
        %399 = vmatprep.subr.mxu0 0.0
        %400 = vmatpush1.msra.mxu0 0.0
        %401 = vmatprep.subr.mxu0 0.0
        %402 = vmatpush1.msra.mxu0 0.0
        %403 = vmatprep.subr.mxu0 0.0
        %404 = vmatpush1.msra.mxu0 0.0
        %405 = vmatprep.subr.mxu0 0.0
        %406 = vmatpush1.msra.mxu0 0.0
        %407 = vmatprep.subr.mxu0 0.0
        %408 = vmatpush1.msra.mxu0 0.0
        %409 = vmatprep.subr.mxu0 0.0
        %410 = vmatpush1.msra.mxu0 0.0
        %411 = vmatprep.subr.mxu0 0.0
        %412 = vmatpush1.msra.mxu0 0.0
        %413 = vmatprep.subr.mxu0 0.0
        %414 = vmatpush1.msra.mxu0 0.0
        %415 = vmatprep.subr.mxu0 0.0
        %416 = vmatpush1.msra.mxu0 0.0
        %417 = vmatprep.subr.mxu0 0.0
        %418 = vmatpush1.msra.mxu0 0.0
        %419 = vmatprep.subr.mxu0 0.0
        %420 = vmatpush1.msra.mxu0 0.0
        %421 = vmatprep.subr.mxu0 0.0
        %422 = vmatpush1.msra.mxu0 0.0
        %423 = vmatprep.subr.mxu0 0.0
        %424 = vmatpush1.msra.mxu0 0.0
        %425 = vmatprep.mubr.f32.mxu0 0.0
        %426 = vmatmul.mubr.f32.gmra.mrb[0].mxu0 %v356
        %v427 = vpop.f32.mrb[0].mxu0
        %v428 = vadd.f32 %v352, %v427
        %v429 = vpop.f32.mrb[0].mxu0
        %430 = vdwg.mxu0
        %v431 = vld [vmem:[%s4] sm:$0xff]
        %433 = vset.pattern.permute.xlu0 0
        %434 = vperm.xlu0 %433, %v431
        %v435 = vpop.permute.xlu0 %434
        %v437 = vadd.f32 %v428, %v435
        %v438 = vmax.f32 %v437, 0.0
        %vm439 = vcmask 130048
        %440 = vst.msk [vmem:[%s258] sm:$0xff] %vm439, %v438
        %s441 = sand.u32 %s160, 1
        %s442 = scalar_lea.sflag [#allocation3], %s441
        %s443 = sand.u32 %s160, 1
        %s444 = smul.addr %s443, 8
        %s445 = scalar_lea.vmem [#allocation2], %s444
        // Predicated region
        $region41: #{skip_forward.1} parent=39 // pred_check
          %p446 = pneg %p170
        $region42: #{skip_forward.1} parent=39 // pred_check_branch
          %448 = sbr.rel (%p446) target = $region44
        $region43: #{skip_forward.1} parent=39 // pred_region
          %s450 = ssub.s32 128, 128
          %451 = vsyncadd %s442, %s450
          %s452 = sadd.s32 %s24, %s23
          %s453 = smul.addr %s452, 128
          %s454 = scalar_lea.hbm %s5, %s453
          %s456 = sshll.u32 %s445, 4
          %s457 = int_to_ptr.vmem [resolvable:$true] %s456
          %459 = dma.vmem_to_hbm [thread:$0]  %s457, 128, %s454, %s442
        $region44: #{skip_forward.1} parent=39 // pred_fallthru
          _
      $region40: #{skip_forward.1} parent=5 // pred_fallthru
        _
      %p460 = scmp.le.s32.totalorder 2, %s14
      // Predicated region
      $region45: #{skip_forward.1} parent=5 // pred_check
        %p461 = pneg %p460
      $region46: #{skip_forward.1} parent=5 // pred_check_branch
        %463 = sbr.rel (%p461) target = $region48
      $region47: #{skip_forward.1} parent=5 // pred_region
        %s464 = ssub.s32 %s14, 2
        // Predicated region
        $region49: #{skip_forward.1} parent=47 // pred_check
          %p465 = pneg %p176
        $region50: #{skip_forward.1} parent=47 // pred_check_branch
          %467 = sbr.rel (%p465) target = $region52
        $region51: #{skip_forward.1} parent=47 // pred_region
          %s468 = sand.u32 %s161, 1
          %s469 = scalar_lea.sflag [#allocation3], %s468
          %s470 = sand.u32 %s161, 1
          %s471 = smul.addr %s470, 8
          %s472 = scalar_lea.vmem [#allocation2], %s471
          %473 = dma.done %s469, 128
        $region52: #{skip_forward.1} parent=47 // pred_fallthru
          _
      $region48: #{skip_forward.1} parent=5 // pred_fallthru
        _
    $region6: #{skip_forward.1} parent=1 // loop_footer
      %s18 = sadd.s32 1, %s14
    $region7: #{skip_forward.1} parent=1 // loop_footer_branch
      %13 = sbr.rel target = $region3
    $region8: #{skip_forward.1} parent=1 // loop_exit
      _
    %474 = vsyncpa [#allocation3], 1
    %s475 = scalar_lea.sflag [#allocation3], 1
    %476 = vsyncpa %s475, 1

</llo_original>
